<compile_context>
chip_gen: v5e
topology: v5e:2x2
jax: 0.10.0
libtpu: 0.0.40
codegen_flags: <defaults>
</compile_context>

<pallas_src>
import jax
import jax.numpy as jnp
from jax.experimental import pallas as pl
from jax.experimental.pallas import tpu as pltpu


def _round_up(v, m):
    return (v + m - 1) // m * m


def _largest_divisor_tile(n_pad, max_tile, quantum=128):
    """Largest multiple of `quantum` that divides n_pad and is <= max_tile."""
    best = quantum  # n_pad is always a multiple of `quantum`
    t = quantum
    limit = min(max_tile, n_pad)
    while t <= limit:
        if n_pad % t == 0:
            best = t
        t += quantum
    return best


def _detect_vmem_bytes():
    try:
        return int(pltpu.get_tpu_info().vmem_capacity_bytes)
    except Exception:
        return 64 << 20  # conservative (v7x per-TC VMEM)


def prepare_adj(adj):
    """One-time pad+cast of the adjacency (call once, reuse across forwards)."""
    n = adj.shape[0]
    n_pad = _round_up(n, 128)
    return jnp.zeros((n_pad, n_pad), jnp.bfloat16).at[:n, :n].set(
        adj.astype(jnp.bfloat16))


# ---------------- Pass 1: g = relu(adj @ xw1 + b1) @ w2  -> [N, out_p] bf16 ----

def _make_pass1_kernel(resident, tk):
    def kernel(adj_ref, xw1_ref, b1_ref, w2_ref, g_ref, acc_ref):
        k = pl.program_id(1)

        @pl.when(k == 0)
        def _():
            acc_ref[...] = jnp.zeros_like(acc_ref)

        if resident:
            start = pl.multiple_of(k * tk, 128)
            rhs = xw1_ref[pl.ds(start, tk), :]
        else:
            rhs = xw1_ref[...]
        acc_ref[...] += jnp.dot(adj_ref[...], rhs,
                                preferred_element_type=jnp.float32)

        @pl.when(k == pl.num_programs(1) - 1)
        def _():
            h = jnp.maximum(acc_ref[...] + b1_ref[...], 0.0)
            g = jnp.dot(h.astype(w2_ref.dtype), w2_ref[...],
                        preferred_element_type=jnp.float32)
            g_ref[...] = g.astype(g_ref.dtype)

    return kernel


# ---------------- Pass 2: out = adj @ g + b2  -> [N, out_p] f32 ---------------

def _make_pass2_kernel(resident, tk):
    def kernel(adj_ref, g_ref, b2_ref, out_ref, acc_ref):
        k = pl.program_id(1)

        @pl.when(k == 0)
        def _():
            acc_ref[...] = jnp.zeros_like(acc_ref)

        if resident:
            start = pl.multiple_of(k * tk, 128)
            rhs = g_ref[pl.ds(start, tk), :]
        else:
            rhs = g_ref[...]
        acc_ref[...] += jnp.dot(adj_ref[...], rhs,
                                preferred_element_type=jnp.float32)

        @pl.when(k == pl.num_programs(1) - 1)
        def _():
            out_ref[...] = (acc_ref[...] + b2_ref[...]).astype(out_ref.dtype)

    return kernel


def gnn_forward(x, adj, w1, b1, w2, b2, *, adj_padded=None,
                tile_m=512, tile_k=1024):
    """x: [N, in_f], adj: [N, N] (or pass prepare_adj(adj) via adj_padded),
    w1: [in_f, hid], b1: [hid] or [1, hid], w2: [hid, out_f], b2: [out_f] or
    [1, out_f]  ->  [N, out_f] float32 (== PyTorch fc(x) = x @ W^T + b with
    weights supplied pre-transposed as [in, out])."""
    n, in_f = x.shape
    hid = w1.shape[1]
    out_f = w2.shape[1]
    f32, bf16 = jnp.float32, jnp.bfloat16

    # ---- padding: N only to 128 (never to the tile size); features to 128 ----
    n_pad = _round_up(n, 128)
    hid_p = _round_up(hid, 128)
    out_p = _round_up(out_f, 128)

    # ---- tile selection: largest 128-multiples dividing n_pad ----
    tm = _largest_divisor_tile(n_pad, tile_m)
    tk = _largest_divisor_tile(n_pad, tile_k)
    # v7x has 2 TensorCores sharded over the "parallel" axis: guarantee >=2 tiles
    if n_pad // tm < 2:
        tm = max(64, n_pad // 2)   # n_pad is a 128-multiple -> tm is an 8-multiple

    # ---- generation-aware VMEM budget ----
    vmem_cap = _detect_vmem_bytes()                    # 64 MiB v7x, 128 MiB v5e/v6e
    vmem_limit = min(int(vmem_cap * 0.75), 100 << 20)

    # Decide whether the K-side operand (xw1 / g) is fully VMEM-resident.
    feat_max = max(hid_p, out_p)
    resident_bytes = 2 * n_pad * feat_max * 2          # conservative: 2 buffers, bf16
    per_pass_fixed = (2 * tm * tk * 2                  # adj tile, double-buffered
                      + tm * feat_max * 4              # f32 accumulator
                      + 2 * tm * feat_max * 4          # output tile (f32 worst case)
                      + 2 * (hid_p * out_p + hid_p + out_p) * 4)  # weights/biases
    resident = (resident_bytes + per_pass_fixed) <= int(vmem_limit * 0.8)

    # ---- operand prep (adj pad/cast ideally hoisted out via adj_padded) ----
    adj_p = adj_padded if adj_padded is not None else prepare_adj(adj)
    assert adj_p.shape == (n_pad, n_pad) and adj_p.dtype == bf16

    # layer-1 associativity reorder: tiny [N,in_f]x[in_f,hid] matmul up front
    xw1 = x.astype(f32) @ w1.astype(f32)
    xw1_p = jnp.zeros((n_pad, hid_p), bf16).at[:n, :hid].set(xw1.astype(bf16))
    w2_p = jnp.zeros((hid_p, out_p), bf16).at[:hid, :out_f].set(w2.astype(bf16))
    b1_p = jnp.zeros((1, hid_p), f32).at[0, :hid].set(b1.reshape(-1).astype(f32))
    b2_p = jnp.zeros((1, out_p), f32).at[0, :out_f].set(b2.reshape(-1).astype(f32))

    grid = (n_pad // tm, n_pad // tk)
    cparams = pltpu.CompilerParams(
        dimension_semantics=("parallel", "arbitrary"),
        vmem_limit_bytes=vmem_limit,
    )

    if resident:
        xw1_spec = pl.BlockSpec((n_pad, hid_p), lambda i, k: (0, 0))
        g_spec = pl.BlockSpec((n_pad, out_p), lambda i, k: (0, 0))
    else:
        xw1_spec = pl.BlockSpec((tk, hid_p), lambda i, k: (k, 0))
        g_spec = pl.BlockSpec((tk, out_p), lambda i, k: (k, 0))

    # ---- pass 1: g = relu(adj @ xw1 + b1) @ w2 ----
    cost1 = pl.CostEstimate(
        flops=2 * n_pad * n_pad * hid_p + 2 * n_pad * hid_p * out_p,
        transcendentals=0,
        bytes_accessed=(adj_p.size * 2 + xw1_p.size * 2 + w2_p.size * 2
                        + b1_p.size * 4 + n_pad * out_p * 2),
    )
    g = pl.pallas_call(
        _make_pass1_kernel(resident, tk),
        out_shape=jax.ShapeDtypeStruct((n_pad, out_p), bf16),
        grid=grid,
        in_specs=[
            pl.BlockSpec((tm, tk), lambda i, k: (i, k)),        # adj
            xw1_spec,                                           # xw1 (K-side)
            pl.BlockSpec((1, hid_p), lambda i, k: (0, 0)),      # b1
            pl.BlockSpec((hid_p, out_p), lambda i, k: (0, 0)),  # w2
        ],
        out_specs=pl.BlockSpec((tm, out_p), lambda i, k: (i, 0)),
        scratch_shapes=[pltpu.VMEM((tm, hid_p), jnp.float32)],
        compiler_params=cparams,
        cost_estimate=cost1,
    )(adj_p, xw1_p, b1_p, w2_p)

    # ---- pass 2: out = adj @ g + b2 ----
    cost2 = pl.CostEstimate(
        flops=2 * n_pad * n_pad * out_p,
        transcendentals=0,
        bytes_accessed=(adj_p.size * 2 + n_pad * out_p * 2 + b2_p.size * 4
                        + n_pad * out_p * 4),
    )
    out = pl.pallas_call(
        _make_pass2_kernel(resident, tk),
        out_shape=jax.ShapeDtypeStruct((n_pad, out_p), f32),
        grid=grid,
        in_specs=[
            pl.BlockSpec((tm, tk), lambda i, k: (i, k)),     # adj
            g_spec,                                          # g (K-side)
            pl.BlockSpec((1, out_p), lambda i, k: (0, 0)),   # b2
        ],
        out_specs=pl.BlockSpec((tm, out_p), lambda i, k: (i, 0)),
        scratch_shapes=[pltpu.VMEM((tm, out_p), jnp.float32)],
        compiler_params=cparams,
        cost_estimate=cost2,
    )(adj_p, g, b2_p)

    return out[:n, :out_f]


def _reference(x, adj, w1, b1, w2, b2):
    h = adj @ x
    h = jnp.maximum(h @ w1 + b1, 0.0)
    h = adj @ h
    return h @ w2 + b2


if __name__ == "__main__":
    key = jax.random.PRNGKey(0)
    N, IN_F, HID, OUT_F = 16, 16, 32, 8

    k_x, k_adj, k_w1, k_b1, k_w2, k_b2 = jax.random.split(key, 6)

    x = jax.random.normal(k_x, (N, IN_F), dtype=jnp.float32)
    # simple symmetric 0/1 adjacency with self loops
    a = (jax.random.uniform(k_adj, (N, N)) > 0.7).astype(jnp.float32)
    adj = jnp.clip(a + a.T + jnp.eye(N, dtype=jnp.float32), 0.0, 1.0)

    # deterministic "Linear" params; stored pre-transposed as [in, out]
    w1 = jax.random.normal(k_w1, (IN_F, HID), dtype=jnp.float32) * 0.1
    b1 = jax.random.normal(k_b1, (1, HID), dtype=jnp.float32) * 0.1
    w2 = jax.random.normal(k_w2, (HID, OUT_F), dtype=jnp.float32) * 0.1
    b2 = jax.random.normal(k_b2, (1, OUT_F), dtype=jnp.float32) * 0.1

    # pad/cast adjacency ONCE and reuse (hoisted out of the hot path)
    adj_p = prepare_adj(adj)

    out = gnn_forward(x, adj, w1, b1, w2, b2, adj_padded=adj_p)
    out = jax.block_until_ready(out)

    ref = _reference(x, adj, w1, b1, w2, b2)
    assert out.shape == (N, OUT_F)
    max_err = float(jnp.max(jnp.abs(out - ref)))
    # bf16 matmul operands (f32 accumulation) + associativity reorders -> loose tol
    assert jnp.allclose(out, ref, atol=1e-1, rtol=1e-1), f"max abs err {max_err}"

    print("KERNEL_OK")
</pallas_src>

<mosaic_0001>
module attributes {stable_mosaic.version = 11 : i64} {
  func.func @kernel(%arg0: i32, %arg1: i32, %arg2: memref<64x128xbf16, #tpu.memory_space<vmem>>, %arg3: memref<128x128xbf16, #tpu.memory_space<vmem>>, %arg4: memref<1x128xf32, #tpu.memory_space<vmem>>, %arg5: memref<128x128xbf16, #tpu.memory_space<vmem>>, %arg6: memref<64x128xbf16, #tpu.memory_space<vmem>>, %arg7: memref<64x128xf32, #tpu.memory_space<vmem>>) attributes {dimension_semantics = [#tpu.dimension_semantics<parallel>, #tpu.dimension_semantics<arbitrary>], iteration_bounds = array<i64: 2, 1>, scalar_prefetch = 0 : i64, scratch_operands = 1 : i64, tpu.core_type = #tpu.core_type<tc>, window_params = [{transform_indices = @transform_0, window_bounds = array<i64: 64, 128>}, {pipeline_mode = #tpu.pipeline_mode<synchronous>, transform_indices = @transform_1, window_bounds = array<i64: 128, 128>}, {pipeline_mode = #tpu.pipeline_mode<synchronous>, transform_indices = @transform_2, window_bounds = array<i64: 1, 128>}, {pipeline_mode = #tpu.pipeline_mode<synchronous>, transform_indices = @transform_3, window_bounds = array<i64: 128, 128>}, {transform_indices = @transform_4, window_bounds = array<i64: 64, 128>}]} {
    %c0_i32 = arith.constant 0 : i32
    %0 = arith.cmpi eq, %arg1, %c0_i32 : i32
    %1 = arith.extui %0 : i1 to i32
    %c0_i32_0 = arith.constant 0 : i32
    %2 = arith.cmpi ne, %1, %c0_i32_0 : i32
    scf.if %2 {
      %cst_9 = arith.constant 0.000000e+00 : f32
      %15 = vector.broadcast %cst_9 : f32 to vector<64x128xf32>
      %c0_10 = arith.constant 0 : index
      %c0_11 = arith.constant 0 : index
      %16 = vector.load %arg7[%c0_10, %c0_11] : memref<64x128xf32, #tpu.memory_space<vmem>>, vector<64x128xf32>
      tpu.vector_store %arg7[%c0_10, %c0_11], %15 {strides = array<i32>} : memref<64x128xf32, #tpu.memory_space<vmem>>, vector<64x128xf32>,
    } else {
    }
    %c128_i32 = arith.constant 128 : i32
    %3 = arith.muli %arg1, %c128_i32 : i32
    %4 = tpu.assume_multiple %3, 128 : i32
    %5 = arith.index_cast %4 : i32 to index
    %c0 = arith.constant 0 : index
    %6 = vector.load %arg3[%5, %c0] : memref<128x128xbf16, #tpu.memory_space<vmem>>, vector<128x128xbf16>
    %c0_1 = arith.constant 0 : index
    %c0_2 = arith.constant 0 : index
    %7 = vector.load %arg7[%c0_1, %c0_2] : memref<64x128xf32, #tpu.memory_space<vmem>>, vector<64x128xf32>
    %c0_3 = arith.constant 0 : index
    %c0_4 = arith.constant 0 : index
    %8 = vector.load %arg2[%c0_3, %c0_4] : memref<64x128xbf16, #tpu.memory_space<vmem>>, vector<64x128xbf16>
    %cst = arith.constant dense<0.000000e+00> : vector<64x128xf32>
    %9 = tpu.matmul %8, %6, %cst {dimension_numbers = #tpu.dot_dimension_numbers<[1], [0], [0], [1], [0, 0, 1, 1], [], []>} : vector<64x128xbf16>, vector<128x128xbf16>, vector<64x128xf32> -> vector<64x128xf32>
    %10 = arith.addf %7, %9 : vector<64x128xf32>
    %c0_5 = arith.constant 0 : index
    %c0_6 = arith.constant 0 : index
    %11 = vector.load %arg7[%c0_5, %c0_6] : memref<64x128xf32, #tpu.memory_space<vmem>>, vector<64x128xf32>
    tpu.vector_store %arg7[%c0_5, %c0_6], %10 {strides = array<i32>} : memref<64x128xf32, #tpu.memory_space<vmem>>, vector<64x128xf32>,
    %c0_i32_7 = arith.constant 0 : i32
    %12 = arith.cmpi eq, %arg1, %c0_i32_7 : i32
    %13 = arith.extui %12 : i1 to i32
    %c0_i32_8 = arith.constant 0 : i32
    %14 = arith.cmpi ne, %13, %c0_i32_8 : i32
    scf.if %14 {
      %c0_9 = arith.constant 0 : index
      %c0_10 = arith.constant 0 : index
      %15 = vector.load %arg7[%c0_9, %c0_10] : memref<64x128xf32, #tpu.memory_space<vmem>>, vector<64x128xf32>
      %c0_11 = arith.constant 0 : index
      %c0_12 = arith.constant 0 : index
      %16 = vector.load %arg4[%c0_11, %c0_12] : memref<1x128xf32, #tpu.memory_space<vmem>>, vector<1x128xf32>
      %17 = vector.broadcast %16 : vector<1x128xf32> to vector<64x128xf32>
      %18 = arith.addf %15, %17 : vector<64x128xf32>
      %cst_13 = arith.constant 0.000000e+00 : f32
      %19 = vector.broadcast %cst_13 : f32 to vector<64x128xf32>
      %20 = arith.maximumf %18, %19 : vector<64x128xf32>
      %21 = arith.truncf %20 : vector<64x128xf32> to vector<64x128xbf16>
      %c0_14 = arith.constant 0 : index
      %c0_15 = arith.constant 0 : index
      %22 = vector.load %arg5[%c0_14, %c0_15] : memref<128x128xbf16, #tpu.memory_space<vmem>>, vector<128x128xbf16>
      %cst_16 = arith.constant dense<0.000000e+00> : vector<64x128xf32>
      %23 = tpu.matmul %21, %22, %cst_16 {dimension_numbers = #tpu.dot_dimension_numbers<[1], [0], [0], [1], [0, 0, 1, 1], [], []>} : vector<64x128xbf16>, vector<128x128xbf16>, vector<64x128xf32> -> vector<64x128xf32>
      %24 = arith.truncf %23 : vector<64x128xf32> to vector<64x128xbf16>
      %c0_17 = arith.constant 0 : index
      %c0_18 = arith.constant 0 : index
      %25 = vector.load %arg6[%c0_17, %c0_18] : memref<64x128xbf16, #tpu.memory_space<vmem>>, vector<64x128xbf16>
      tpu.vector_store %arg6[%c0_17, %c0_18], %24 {strides = array<i32>} : memref<64x128xbf16, #tpu.memory_space<vmem>>, vector<64x128xbf16>,
    } else {
    }
    return
  }
  func.func @transform_0(%arg0: i32, %arg1: i32) -> (i32, i32) {
    %c0_i32 = arith.constant 0 : i32
    return %arg0, %arg1 : i32, i32
  }
  func.func @transform_1(%arg0: i32, %arg1: i32) -> (i32, i32) {
    %c0_i32 = arith.constant 0 : i32
    %c0_i32_0 = arith.constant 0 : i32
    %c0_i32_1 = arith.constant 0 : i32
    return %c0_i32, %c0_i32_0 : i32, i32
  }
  func.func @transform_2(%arg0: i32, %arg1: i32) -> (i32, i32) {
    %c0_i32 = arith.constant 0 : i32
    %c0_i32_0 = arith.constant 0 : i32
    %c0_i32_1 = arith.constant 0 : i32
    return %c0_i32, %c0_i32_0 : i32, i32
  }
  func.func @transform_3(%arg0: i32, %arg1: i32) -> (i32, i32) {
    %c0_i32 = arith.constant 0 : i32
    %c0_i32_0 = arith.constant 0 : i32
    %c0_i32_1 = arith.constant 0 : i32
    return %c0_i32, %c0_i32_0 : i32, i32
  }
  func.func @transform_4(%arg0: i32, %arg1: i32) -> (i32, i32) {
    %c0_i32 = arith.constant 0 : i32
    %c0_i32_0 = arith.constant 0 : i32
    return %arg0, %c0_i32 : i32, i32
  }
}

</mosaic_0001>

<llo_original>
// kernel: tpu_custom_call.1
$region0: #{tpu_custom_call.1}
  #allocation0 [shape = 'u32[]', space=smem, size = 0x4, offset = 0x4, fixed_abs, tag = 'smem constant byte address 0x4 - core index']
  #allocation1 [shape = 'u32[72,128]{1,0:T(1,128)}', space=vmem, size = 0x9000, scoped, tag = 'internal scratch']
  #allocation2 [shape = 'f32[64,128]{1,0:T(8,128)}', space=vmem, size = 0x8000, scoped, tag = 'scratch operand']
  %s0 = inlined_call_operand.hbm [shape: bf16[128,128], index: 0, kind: input, shape index: {}]
  %s1 = inlined_call_operand.hbm [shape: bf16[128,128], index: 1, kind: input, shape index: {}]
  %s2 = inlined_call_operand.vmem [shape: f32[1,128], index: 2, kind: input, shape index: {}]
  %s3 = inlined_call_operand.hbm [shape: bf16[128,128], index: 3, kind: input, shape index: {}]
  %s4 = inlined_call_operand.hbm [shape: bf16[128,128], index: 4, kind: output, shape index: {}]
  %s5 = sld [smem:[#allocation0]]
  $region69: #{tpu_custom_call.1} parent=0
    _
  %s7 = ssub.s32 1, %s5
  %s8 = scalar_select 0, %s7, %s5
  $region1: #{tpu_custom_call.1} parent=0
    #allocation3 [shape = 'u8[32768]{0}', space=vmem, size = 0x8000, scoped, tag = 'input window, operand 0']
    #allocation4 [shape = 's32[2]{0}', space=sflag, size = 0x8, scoped, tag = 'scoped memory for tpu_custom_call.1']
    #allocation5 [shape = 's32[2]{0}', space=sflag, size = 0x8, scoped, tag = 'scoped memory for tpu_custom_call.1']
    #allocation6 [shape = 'u8[32768]{0}', space=vmem, size = 0x8000, scoped, tag = 'input window, operand 1, single buffered']
    #allocation7 [shape = 's32[1]{0}', space=sflag, size = 0x4, scoped, tag = 'scoped memory for tpu_custom_call.1']
    #allocation8 [shape = 'u8[32768]{0}', space=vmem, size = 0x8000, scoped, tag = 'input window, operand 3, single buffered']
    #allocation9 [shape = 'u8[32768]{0}', space=vmem, size = 0x8000, scoped, tag = 'output window, operand 0']
    %9 = vsyncpa [#allocation4], 0
    %s10 = scalar_lea.sflag [#allocation4], 1
    %11 = vsyncpa %s10, 0
    %12 = vsyncpa [#allocation7], 0
    %13 = vsyncpa [#allocation5], 0
    %s14 = scalar_lea.sflag [#allocation5], 1
    %15 = vsyncpa %s14, 0
    loop: start=0, step=1, limit=4
    $region2: #{tpu_custom_call.1} parent=1 // loop_pre_header
      _
    $region3: #{tpu_custom_call.1} parent=1 // loop_header
      %s17 = sphi 0, %s21
      %p18 = scmp.ge.s32.totalorder %s17, 4
      %s24 = sphi 0, %s36
      %s25 = sphi 0, %s32
      %s26 = sphi 0, %s24
      %s27 = sphi 0, %s25
      %s28 = sphi 0, %s26
      %s29 = sphi 0, %s27
      %s41 = sphi 0, %s43
      %s44 = sphi 0, %s41
      %s45 = sphi 0, %s44
      %s61 = sphi 0, %s45
      %s65 = sphi 0, %s65
      %s67 = sphi 0, %s65
      %s68 = sphi 0, %s67
      %s82 = sphi 0, %s68
      %s86 = sphi 0, %s86
      %s88 = sphi 0, %s86
      %s89 = sphi 0, %s88
      %s103 = sphi 0, %s89
      %s107 = sphi 0, %s107
      %s109 = sphi 0, %s107
      %s110 = sphi 0, %s109
      %s124 = sphi 0, %s110
      %s130 = sphi 0, %s132
      %s133 = sphi 0, %s130
      %s134 = sphi 0, %s133
      %s150 = sphi 0, %s134
    $region4: #{tpu_custom_call.1} parent=1 // loop_header_branch
      %20 = sbr.rel (%p18) target = $region8
    $region5: #{tpu_custom_call.1} parent=1 // loop_body
      %s22 = ssub.s32 %s17, 1
      %s23 = ssub.s32 %s17, 2
      %s30 = sadd.s32 1, %s25
      %p31 = scmp.ge.s32.totalorder %s30, 1
      %s32 = scalar_select %p31, 0, %s30
      %s33 = sadd.s32 1, %s24
      %s34 = scalar_select %p31, %s33, %s24
      %p35 = scmp.ge.s32.totalorder %s34, 2
      %s36 = scalar_select %p35, 0, %s34
      %s37 = ssub.s32 %s24, %s36
      %s38 = ssub.s32 %s25, %s32
      %s39 = sor.u32 %s37, %s38
      %p40 = scmp.eq.s32.totalorder %s39, 0
      %s42 = sadd.s32 %s41, 1
      %s43 = scalar_select %p40, %s41, %s42
      %p46 = pneg %p40
      %p47 = scmp.eq.s32.totalorder %s17, 1
      %p48 = por %p46, %p47
      %p49 = scmp.ne.s32.totalorder %s41, %s44
      %p50 = scmp.eq.s32.totalorder %s17, 0
      %p51 = por %p49, %p50
      %p52 = scmp.ne.s32.totalorder %s41, %s44
      %p53 = scmp.eq.s32.totalorder %s22, 1
      %p54 = por %p52, %p53
      %p55 = scmp.ne.s32.totalorder %s44, %s45
      %p56 = scmp.eq.s32.totalorder %s22, 0
      %p57 = por %p55, %p56
      %p58 = scmp.ne.s32.totalorder %s44, %s45
      %p59 = scmp.eq.s32.totalorder %s23, 1
      %p60 = por %p58, %p59
      %p62 = scmp.ne.s32.totalorder %s45, %s61
      %p63 = scmp.eq.s32.totalorder %s23, 0
      %p64 = por %p62, %p63
      %s66 = sadd.s32 %s65, 1
      %p69 = scmp.eq.s32.totalorder %s17, 1
      %p70 = scmp.ne.s32.totalorder %s65, %s67
      %p71 = scmp.eq.s32.totalorder %s17, 0
      %p72 = por %p70, %p71
      %p73 = scmp.ne.s32.totalorder %s65, %s67
      %p74 = scmp.eq.s32.totalorder %s22, 1
      %p75 = por %p73, %p74
      %p76 = scmp.ne.s32.totalorder %s67, %s68
      %p77 = scmp.eq.s32.totalorder %s22, 0
      %p78 = por %p76, %p77
      %p79 = scmp.ne.s32.totalorder %s67, %s68
      %p80 = scmp.eq.s32.totalorder %s23, 1
      %p81 = por %p79, %p80
      %p83 = scmp.ne.s32.totalorder %s68, %s82
      %p84 = scmp.eq.s32.totalorder %s23, 0
      %p85 = por %p83, %p84
      %s87 = sadd.s32 %s86, 1
      %p90 = scmp.eq.s32.totalorder %s17, 1
      %p91 = scmp.ne.s32.totalorder %s86, %s88
      %p92 = scmp.eq.s32.totalorder %s17, 0
      %p93 = por %p91, %p92
      %p94 = scmp.ne.s32.totalorder %s86, %s88
      %p95 = scmp.eq.s32.totalorder %s22, 1
      %p96 = por %p94, %p95
      %p97 = scmp.ne.s32.totalorder %s88, %s89
      %p98 = scmp.eq.s32.totalorder %s22, 0
      %p99 = por %p97, %p98
      %p100 = scmp.ne.s32.totalorder %s88, %s89
      %p101 = scmp.eq.s32.totalorder %s23, 1
      %p102 = por %p100, %p101
      %p104 = scmp.ne.s32.totalorder %s89, %s103
      %p105 = scmp.eq.s32.totalorder %s23, 0
      %p106 = por %p104, %p105
      %s108 = sadd.s32 %s107, 1
      %p111 = scmp.eq.s32.totalorder %s17, 1
      %p112 = scmp.ne.s32.totalorder %s107, %s109
      %p113 = scmp.eq.s32.totalorder %s17, 0
      %p114 = por %p112, %p113
      %p115 = scmp.ne.s32.totalorder %s107, %s109
      %p116 = scmp.eq.s32.totalorder %s22, 1
      %p117 = por %p115, %p116
      %p118 = scmp.ne.s32.totalorder %s109, %s110
      %p119 = scmp.eq.s32.totalorder %s22, 0
      %p120 = por %p118, %p119
      %p121 = scmp.ne.s32.totalorder %s109, %s110
      %p122 = scmp.eq.s32.totalorder %s23, 1
      %p123 = por %p121, %p122
      %p125 = scmp.ne.s32.totalorder %s110, %s124
      %p126 = scmp.eq.s32.totalorder %s23, 0
      %p127 = por %p125, %p126
      %s128 = ssub.s32 %s24, %s36
      %p129 = scmp.eq.s32.totalorder %s128, 0
      %s131 = sadd.s32 %s130, 1
      %s132 = scalar_select %p129, %s130, %s131
      %p135 = pneg %p129
      %p136 = scmp.eq.s32.totalorder %s17, 1
      %p137 = por %p135, %p136
      %p138 = scmp.ne.s32.totalorder %s130, %s133
      %p139 = scmp.eq.s32.totalorder %s17, 0
      %p140 = por %p138, %p139
      %p141 = scmp.ne.s32.totalorder %s130, %s133
      %p142 = scmp.eq.s32.totalorder %s22, 1
      %p143 = por %p141, %p142
      %p144 = scmp.ne.s32.totalorder %s133, %s134
      %p145 = scmp.eq.s32.totalorder %s22, 0
      %p146 = por %p144, %p145
      %p147 = scmp.ne.s32.totalorder %s133, %s134
      %p148 = scmp.eq.s32.totalorder %s23, 1
      %p149 = por %p147, %p148
      %p151 = scmp.ne.s32.totalorder %s134, %s150
      %p152 = scmp.eq.s32.totalorder %s23, 0
      %p153 = por %p151, %p152
      %p154 = scmp.le.s32.totalorder 1, %s17
      %p155 = scmp.lt.s32.totalorder %s17, 3
      %p156 = pnand %p154, %p155
      %p157 = pneg %p156
      // Predicated region
      $region9: #{tpu_custom_call.1} parent=5 // pred_check
        _
      $region10: #{tpu_custom_call.1} parent=5 // pred_check_branch
        %159 = sbr.rel (%p156) target = $region12
      $region11: #{tpu_custom_call.1} parent=5 // pred_region
        %s160 = ssub.s32 %s17, 1
        // Predicated region
        $region13: #{tpu_custom_call.1} parent=11 // pred_check
          %p161 = pneg %p78
        $region14: #{tpu_custom_call.1} parent=11 // pred_check_branch
          %163 = sbr.rel (%p161) target = $region16
        $region15: #{tpu_custom_call.1} parent=11 // pred_region
          %165 = vsyncadd [#allocation7], 0
          %s166 = sshll.u32 %s1, 4
          %s167 = int_to_ptr.hbm [resolvable:$true] %s166
          %s168 = sshll.u32 [#allocation6], 4
          %s169 = int_to_ptr.vmem [resolvable:$true] %s168
          %174 = dma.hbm_to_vmem [thread:$0]  %s167, 1024, %s169, [#allocation7], 64, 64, 4
        $region16: #{tpu_custom_call.1} parent=11 // pred_fallthru
          _
        // Predicated region
        $region17: #{tpu_custom_call.1} parent=11 // pred_check
          %p175 = pneg %p99
        $region18: #{tpu_custom_call.1} parent=11 // pred_check_branch
          %177 = sbr.rel (%p175) target = $region20
        $region19: #{tpu_custom_call.1} parent=11 // pred_region
          _
        $region20: #{tpu_custom_call.1} parent=11 // pred_fallthru
          _
        // Predicated region
        $region21: #{tpu_custom_call.1} parent=11 // pred_check
          %p178 = pneg %p120
        $region22: #{tpu_custom_call.1} parent=11 // pred_check_branch
          %180 = sbr.rel (%p178) target = $region24
        $region23: #{tpu_custom_call.1} parent=11 // pred_region
          %182 = vsyncadd [#allocation7], 0
          %s183 = sshll.u32 %s3, 4
          %s184 = int_to_ptr.hbm [resolvable:$true] %s183
          %s185 = sshll.u32 [#allocation8], 4
          %s186 = int_to_ptr.vmem [resolvable:$true] %s185
          %191 = dma.hbm_to_vmem [thread:$0]  %s184, 1024, %s186, [#allocation7], 64, 64, 4
        $region24: #{tpu_custom_call.1} parent=11 // pred_fallthru
          _
      $region12: #{tpu_custom_call.1} parent=5 // pred_fallthru
        _
      %p192 = scmp.lt.s32.totalorder %s17, 2
      // Predicated region
      $region25: #{tpu_custom_call.1} parent=5 // pred_check
        %p193 = pneg %p192
      $region26: #{tpu_custom_call.1} parent=5 // pred_check_branch
        %195 = sbr.rel (%p193) target = $region28
      $region27: #{tpu_custom_call.1} parent=5 // pred_region
        // Predicated region
        $region29: #{tpu_custom_call.1} parent=27 // pred_check
          %p196 = pneg %p51
        $region30: #{tpu_custom_call.1} parent=27 // pred_check_branch
          %198 = sbr.rel (%p196) target = $region32
        $region31: #{tpu_custom_call.1} parent=27 // pred_region
          %s199 = sand.u32 %s41, 1
          %s200 = scalar_lea.sflag [#allocation4], %s199
          %s201 = sand.u32 %s41, 1
          %s202 = smul.addr %s201, 32
          %s203 = scalar_lea.vmem [#allocation3], %s202
          %s204 = smul.u32 8, %s24
          %206 = vsyncadd %s200, 0
          %s207 = sadd.s32 %s25, %s204
          %s208 = smul.addr %s207, 4
          %s209 = scalar_lea.hbm %s0, %s208
          %s210 = sshll.u32 %s209, 4
          %s211 = int_to_ptr.hbm [resolvable:$true] %s210
          %s212 = sshll.u32 %s203, 4
          %s213 = int_to_ptr.vmem [resolvable:$true] %s212
          %218 = dma.hbm_to_vmem [thread:$0]  %s211, 512, %s213, %s200, 64, 64, 4
        $region32: #{tpu_custom_call.1} parent=27 // pred_fallthru
          _
      $region28: #{tpu_custom_call.1} parent=5 // pred_fallthru
        _
      %p219 = scmp.le.s32.totalorder 1, %s17
      %p220 = scmp.lt.s32.totalorder %s17, 3
      %p221 = pnand %p219, %p220
      %p222 = pneg %p221
      // Predicated region
      $region33: #{tpu_custom_call.1} parent=5 // pred_check
        _
      $region34: #{tpu_custom_call.1} parent=5 // pred_check_branch
        %224 = sbr.rel (%p221) target = $region36
      $region35: #{tpu_custom_call.1} parent=5 // pred_region
        %s225 = ssub.s32 %s17, 1
        %s226 = sand.u32 %s44, 1
        %s227 = scalar_lea.sflag [#allocation4], %s226
        %s228 = sand.u32 %s44, 1
        %s229 = smul.addr %s228, 32
        %s230 = scalar_lea.vmem [#allocation3], %s229
        // Predicated region
        $region37: #{tpu_custom_call.1} parent=35 // pred_check
          %p231 = pneg %p57
        $region38: #{tpu_custom_call.1} parent=35 // pred_check_branch
          %233 = sbr.rel (%p231) target = $region40
        $region39: #{tpu_custom_call.1} parent=35 // pred_region
          %235 = dma.done %s227, 512
        $region40: #{tpu_custom_call.1} parent=35 // pred_fallthru
          _
        // Predicated region
        $region41: #{tpu_custom_call.1} parent=35 // pred_check
          %p236 = pneg %p78
        $region42: #{tpu_custom_call.1} parent=35 // pred_check_branch
          %238 = sbr.rel (%p236) target = $region44
        $region43: #{tpu_custom_call.1} parent=35 // pred_region
          %240 = dma.done [#allocation7], 1024
        $region44: #{tpu_custom_call.1} parent=35 // pred_fallthru
          _
        // Predicated region
        $region45: #{tpu_custom_call.1} parent=35 // pred_check
          %p241 = pneg %p120
        $region46: #{tpu_custom_call.1} parent=35 // pred_check_branch
          %243 = sbr.rel (%p241) target = $region48
        $region47: #{tpu_custom_call.1} parent=35 // pred_region
          %245 = dma.done [#allocation7], 1024
        $region48: #{tpu_custom_call.1} parent=35 // pred_fallthru
          _
        %s246 = sand.u32 %s44, 1
        %s247 = scalar_lea.sflag [#allocation4], %s246
        %s248 = sand.u32 %s44, 1
        %s249 = smul.addr %s248, 32
        %s250 = scalar_lea.vmem [#allocation3], %s249
        %p251 = pneg %p57
        %p252 = pneg %p54
        %p253 = pneg %p78
        %p254 = pneg %p75
        %p255 = pneg %p99
        %p256 = pneg %p96
        %p257 = pneg %p120
        %p258 = pneg %p117
        %p259 = pneg %p146
        %p260 = pneg %p143
        %s261 = sand.u32 %s133, 1
        %s262 = scalar_lea.sflag [#allocation5], %s261
        %s263 = sand.u32 %s133, 1
        %s264 = smul.addr %s263, 32
        %s265 = scalar_lea.vmem [#allocation9], %s264
        %s266 = smul.u32 8, %s26
        %s267 = smul.u32 8, %s26
        %p268 = scmp.eq.s32.totalorder %s27, 0
        // Predicated region
        $region49: #{tpu_custom_call.1} parent=35 // pred_check
          %p269 = pneg %p268
        $region50: #{tpu_custom_call.1} parent=35 // pred_check_branch
          %271 = sbr.rel (%p269) target = $region52
        $region51: #{tpu_custom_call.1} parent=35 // pred_region
          %272 = vst [vmem:[#allocation2] sm:$0xff] 0.0
          %273 = vst [vmem:[#allocation2 + $0x8] sm:$0xff] 0.0
          %274 = vst [vmem:[#allocation2 + $0x10] sm:$0xff] 0.0
          %275 = vst [vmem:[#allocation2 + $0x18] sm:$0xff] 0.0
          %276 = vst [vmem:[#allocation2 + $0x20] sm:$0xff] 0.0
          %277 = vst [vmem:[#allocation2 + $0x28] sm:$0xff] 0.0
          %278 = vst [vmem:[#allocation2 + $0x30] sm:$0xff] 0.0
          %279 = vst [vmem:[#allocation2 + $0x38] sm:$0xff] 0.0
        $region52: #{tpu_custom_call.1} parent=35 // pred_fallthru
          _
        %s280 = smul.u32 %s27, 128
        %s281 = sshra.s32 %s280, 3
        %s282 = sand.u32 %s280, 7
        %s283 = smul.addr %s281, 4
        %s284 = scalar_lea.vmem [#allocation6], %s283
        %v285 = vld [vmem:[%s284] sm:$0xf]
        %v286 = vld [vmem:[%s284 + $0x4] sm:$0xf]
        %v287 = vld [vmem:[%s284 + $0x8] sm:$0xf]
        %v288 = vld [vmem:[%s284 + $0xc] sm:$0xf]
        %v289 = vld [vmem:[%s284 + $0x10] sm:$0xf]
        %v290 = vld [vmem:[%s284 + $0x14] sm:$0xf]
        %v291 = vld [vmem:[%s284 + $0x18] sm:$0xf]
        %v292 = vld [vmem:[%s284 + $0x1c] sm:$0xf]
        %v293 = vld [vmem:[%s284 + $0x20] sm:$0xf]
        %v294 = vld [vmem:[%s284 + $0x24] sm:$0xf]
        %v295 = vld [vmem:[%s284 + $0x28] sm:$0xf]
        %v296 = vld [vmem:[%s284 + $0x2c] sm:$0xf]
        %v297 = vld [vmem:[%s284 + $0x30] sm:$0xf]
        %v298 = vld [vmem:[%s284 + $0x34] sm:$0xf]
        %v299 = vld [vmem:[%s284 + $0x38] sm:$0xf]
        %v300 = vld [vmem:[%s284 + $0x3c] sm:$0xf]
        %v301 = vld [vmem:[#allocation2] sm:$0xff]
        %v302 = vld [vmem:[#allocation2 + $0x8] sm:$0xff]
        %v303 = vld [vmem:[#allocation2 + $0x10] sm:$0xff]
        %v304 = vld [vmem:[#allocation2 + $0x18] sm:$0xff]
        %v305 = vld [vmem:[#allocation2 + $0x20] sm:$0xff]
        %v306 = vld [vmem:[#allocation2 + $0x28] sm:$0xff]
        %v307 = vld [vmem:[#allocation2 + $0x30] sm:$0xff]
        %v308 = vld [vmem:[#allocation2 + $0x38] sm:$0xff]
        %v309 = vld [vmem:[%s230] sm:$0xf]
        %v310 = vld [vmem:[%s230 + $0x4] sm:$0xf]
        %v311 = vld [vmem:[%s230 + $0x8] sm:$0xf]
        %v312 = vld [vmem:[%s230 + $0xc] sm:$0xf]
        %v313 = vld [vmem:[%s230 + $0x10] sm:$0xf]
        %v314 = vld [vmem:[%s230 + $0x14] sm:$0xf]
        %v315 = vld [vmem:[%s230 + $0x18] sm:$0xf]
        %v316 = vld [vmem:[%s230 + $0x1c] sm:$0xf]
        %v325 = vunpack.c.l.b16 %v309
        %v326 = vunpack.c.l.b16 %v310
        %v327 = vunpack.c.l.b16 %v311
        %v328 = vunpack.c.l.b16 %v312
        %v329 = vunpack.c.l.b16 %v313
        %v330 = vunpack.c.l.b16 %v314
        %v331 = vunpack.c.l.b16 %v315
        %v332 = vunpack.c.l.b16 %v316
        %v333 = vpack.c.b16 %v326, %v325
        %v334 = vpack.c.b16 %v328, %v327
        %v335 = vpack.c.b16 %v330, %v329
        %v336 = vpack.c.b16 %v332, %v331
        %v357 = vunpack.c.l.b16 %v285
        %v358 = vunpack.c.l.b16 %v286
        %v359 = vunpack.c.l.b16 %v287
        %v360 = vunpack.c.l.b16 %v288
        %v361 = vunpack.c.l.b16 %v289
        %v362 = vunpack.c.l.b16 %v290
        %v363 = vunpack.c.l.b16 %v291
        %v364 = vunpack.c.l.b16 %v292
        %v365 = vunpack.c.l.b16 %v293
        %v366 = vunpack.c.l.b16 %v294
        %v367 = vunpack.c.l.b16 %v295
        %v368 = vunpack.c.l.b16 %v296
        %v369 = vunpack.c.l.b16 %v297
        %v370 = vunpack.c.l.b16 %v298
        %v371 = vunpack.c.l.b16 %v299
        %v372 = vunpack.c.l.b16 %v300
        %v373 = vpack.c.b16 %v358, %v357
        %v374 = vpack.c.b16 %v360, %v359
        %v375 = vpack.c.b16 %v362, %v361
        %v376 = vpack.c.b16 %v364, %v363
        %v377 = vpack.c.b16 %v366, %v365
        %v378 = vpack.c.b16 %v368, %v367
        %v379 = vpack.c.b16 %v370, %v369
        %v380 = vpack.c.b16 %v372, %v371
        %389 = vmatpush.bf16.msra.mxu0 %v380
        %390 = vmatpush.bf16.msra.mxu0 %v379
        %391 = vmatpush.bf16.msra.mxu0 %v378
        %392 = vmatpush.bf16.msra.mxu0 %v377
        %393 = vmatpush.bf16.msra.mxu0 %v376
        %394 = vmatpush.bf16.msra.mxu0 %v375
        %395 = vmatpush.bf16.msra.mxu0 %v374
        %396 = vmatpush.bf16.msra.mxu0 %v373
        %397 = vmatmul.bf16.gmra.mxu0 %v333
        %v398 = vpop.f32.mrf.mxu0
        %v399 = vadd.f32 0.0, %v398
        %v400 = vpop.f32.mrf.mxu0
        %v401 = vadd.f32 0.0, %v400
        %402 = vmatmul.bf16.gmra.mxu0 %v334
        %v403 = vpop.f32.mrf.mxu0
        %v404 = vadd.f32 0.0, %v403
        %v405 = vpop.f32.mrf.mxu0
        %v406 = vadd.f32 0.0, %v405
        %407 = vmatmul.bf16.gmra.mxu0 %v335
        %v408 = vpop.f32.mrf.mxu0
        %v409 = vadd.f32 0.0, %v408
        %v410 = vpop.f32.mrf.mxu0
        %v411 = vadd.f32 0.0, %v410
        %412 = vmatmul.bf16.gmra.mxu0 %v336
        %v413 = vpop.f32.mrf.mxu0
        %v414 = vadd.f32 0.0, %v413
        %v415 = vpop.f32.mrf.mxu0
        %v416 = vadd.f32 0.0, %v415
        %417 = vdwg.mxu0
        %v418 = vadd.f32 %v301, %v399
        %v419 = vadd.f32 %v302, %v401
        %v420 = vadd.f32 %v303, %v404
        %v421 = vadd.f32 %v304, %v406
        %v422 = vadd.f32 %v305, %v409
        %v423 = vadd.f32 %v306, %v411
        %v424 = vadd.f32 %v307, %v414
        %v425 = vadd.f32 %v308, %v416
        %426 = vst [vmem:[#allocation2] sm:$0xff] %v418
        %427 = vst [vmem:[#allocation2 + $0x8] sm:$0xff] %v419
        %428 = vst [vmem:[#allocation2 + $0x10] sm:$0xff] %v420
        %429 = vst [vmem:[#allocation2 + $0x18] sm:$0xff] %v421
        %430 = vst [vmem:[#allocation2 + $0x20] sm:$0xff] %v422
        %431 = vst [vmem:[#allocation2 + $0x28] sm:$0xff] %v423
        %432 = vst [vmem:[#allocation2 + $0x30] sm:$0xff] %v424
        %433 = vst [vmem:[#allocation2 + $0x38] sm:$0xff] %v425
        // Predicated region
        $region53: #{tpu_custom_call.1} parent=35 // pred_check
          %p434 = pneg %p268
        $region54: #{tpu_custom_call.1} parent=35 // pred_check_branch
          %436 = sbr.rel (%p434) target = $region56
        $region55: #{tpu_custom_call.1} parent=35 // pred_region
          %v437 = vld [vmem:[#allocation2] sm:$0xff]
          %v438 = vld [vmem:[#allocation2 + $0x8] sm:$0xff]
          %v439 = vld [vmem:[#allocation2 + $0x10] sm:$0xff]
          %v440 = vld [vmem:[#allocation2 + $0x18] sm:$0xff]
          %v441 = vld [vmem:[#allocation2 + $0x20] sm:$0xff]
          %v442 = vld [vmem:[#allocation2 + $0x28] sm:$0xff]
          %v443 = vld [vmem:[#allocation2 + $0x30] sm:$0xff]
          %v444 = vld [vmem:[#allocation2 + $0x38] sm:$0xff]
          %v445 = vld [vmem:[%s2] sm:$0x1]
          %v447 = vperm.slane %v445, 0
          %v449 = vadd.f32 %v437, %v447
          %v450 = vadd.f32 %v438, %v447
          %v451 = vadd.f32 %v439, %v447
          %v452 = vadd.f32 %v440, %v447
          %v453 = vadd.f32 %v441, %v447
          %v454 = vadd.f32 %v442, %v447
          %v455 = vadd.f32 %v443, %v447
          %v456 = vadd.f32 %v444, %v447
          %v457 = vmax.f32 %v449, 0.0
          %v458 = vmax.f32 %v450, 0.0
          %v459 = vmax.f32 %v451, 0.0
          %v460 = vmax.f32 %v452, 0.0
          %v461 = vmax.f32 %v453, 0.0
          %v462 = vmax.f32 %v454, 0.0
          %v463 = vmax.f32 %v455, 0.0
          %v464 = vmax.f32 %v456, 0.0
          %v465 = vpack.c.bf16 %v458, %v457
          %v466 = vpack.c.bf16 %v460, %v459
          %v467 = vpack.c.bf16 %v462, %v461
          %v468 = vpack.c.bf16 %v464, %v463
          %v469 = vld [vmem:[#allocation8] sm:$0xf]
          %v470 = vld [vmem:[#allocation8 + $0x4] sm:$0xf]
          %v471 = vld [vmem:[#allocation8 + $0x8] sm:$0xf]
          %v472 = vld [vmem:[#allocation8 + $0xc] sm:$0xf]
          %v473 = vld [vmem:[#allocation8 + $0x10] sm:$0xf]
          %v474 = vld [vmem:[#allocation8 + $0x14] sm:$0xf]
          %v475 = vld [vmem:[#allocation8 + $0x18] sm:$0xf]
          %v476 = vld [vmem:[#allocation8 + $0x1c] sm:$0xf]
          %v477 = vld [vmem:[#allocation8 + $0x20] sm:$0xf]
          %v478 = vld [vmem:[#allocation8 + $0x24] sm:$0xf]
          %v479 = vld [vmem:[#allocation8 + $0x28] sm:$0xf]
          %v480 = vld [vmem:[#allocation8 + $0x2c] sm:$0xf]
          %v481 = vld [vmem:[#allocation8 + $0x30] sm:$0xf]
          %v482 = vld [vmem:[#allocation8 + $0x34] sm:$0xf]
          %v483 = vld [vmem:[#allocation8 + $0x38] sm:$0xf]
          %v484 = vld [vmem:[#allocation8 + $0x3c] sm:$0xf]
          %v501 = vunpack.c.l.b16 %v469
          %v502 = vunpack.c.l.b16 %v470
          %v503 = vunpack.c.l.b16 %v471
          %v504 = vunpack.c.l.b16 %v472
          %v505 = vunpack.c.l.b16 %v473
          %v506 = vunpack.c.l.b16 %v474
          %v507 = vunpack.c.l.b16 %v475
          %v508 = vunpack.c.l.b16 %v476
          %v509 = vunpack.c.l.b16 %v477
          %v510 = vunpack.c.l.b16 %v478
          %v511 = vunpack.c.l.b16 %v479
          %v512 = vunpack.c.l.b16 %v480
          %v513 = vunpack.c.l.b16 %v481
          %v514 = vunpack.c.l.b16 %v482
          %v515 = vunpack.c.l.b16 %v483
          %v516 = vunpack.c.l.b16 %v484
          %v517 = vpack.c.b16 %v502, %v501
          %v518 = vpack.c.b16 %v504, %v503
          %v519 = vpack.c.b16 %v506, %v505
          %v520 = vpack.c.b16 %v508, %v507
          %v521 = vpack.c.b16 %v510, %v509
          %v522 = vpack.c.b16 %v512, %v511
          %v523 = vpack.c.b16 %v514, %v513
          %v524 = vpack.c.b16 %v516, %v515
          %533 = vmatpush.bf16.msra.mxu0 %v524
          %534 = vmatpush.bf16.msra.mxu0 %v523
          %535 = vmatpush.bf16.msra.mxu0 %v522
          %536 = vmatpush.bf16.msra.mxu0 %v521
          %537 = vmatpush.bf16.msra.mxu0 %v520
          %538 = vmatpush.bf16.msra.mxu0 %v519
          %539 = vmatpush.bf16.msra.mxu0 %v518
          %540 = vmatpush.bf16.msra.mxu0 %v517
          %541 = vmatmul.bf16.gmra.mxu0 %v465
          %v542 = vpop.f32.mrf.mxu0
          %v543 = vadd.f32 0.0, %v542
          %v544 = vpop.f32.mrf.mxu0
          %v545 = vadd.f32 0.0, %v544
          %546 = vmatmul.bf16.gmra.mxu0 %v466
          %v547 = vpop.f32.mrf.mxu0
          %v548 = vadd.f32 0.0, %v547
          %v549 = vpop.f32.mrf.mxu0
          %v550 = vadd.f32 0.0, %v549
          %551 = vmatmul.bf16.gmra.mxu0 %v467
          %v552 = vpop.f32.mrf.mxu0
          %v553 = vadd.f32 0.0, %v552
          %v554 = vpop.f32.mrf.mxu0
          %v555 = vadd.f32 0.0, %v554
          %556 = vmatmul.bf16.gmra.mxu0 %v468
          %v557 = vpop.f32.mrf.mxu0
          %v558 = vadd.f32 0.0, %v557
          %v559 = vpop.f32.mrf.mxu0
          %v560 = vadd.f32 0.0, %v559
          %561 = vdwg.mxu0
          %v562 = vpack.c.bf16 %v543, %v543
          %v563 = vpack.c.bf16 %v545, %v545
          %v564 = vpack.c.bf16 %v548, %v548
          %v565 = vpack.c.bf16 %v550, %v550
          %v566 = vpack.c.bf16 %v553, %v553
          %v567 = vpack.c.bf16 %v555, %v555
          %v568 = vpack.c.bf16 %v558, %v558
          %v569 = vpack.c.bf16 %v560, %v560
          %570 = vst [vmem:[%s265] sm:$0xf] %v562
          %571 = vst [vmem:[%s265 + $0x4] sm:$0xf] %v563
          %572 = vst [vmem:[%s265 + $0x8] sm:$0xf] %v564
          %573 = vst [vmem:[%s265 + $0xc] sm:$0xf] %v565
          %574 = vst [vmem:[%s265 + $0x10] sm:$0xf] %v566
          %575 = vst [vmem:[%s265 + $0x14] sm:$0xf] %v567
          %576 = vst [vmem:[%s265 + $0x18] sm:$0xf] %v568
          %577 = vst [vmem:[%s265 + $0x1c] sm:$0xf] %v569
        $region56: #{tpu_custom_call.1} parent=35 // pred_fallthru
          _
        %s578 = sand.u32 %s133, 1
        %s579 = scalar_lea.sflag [#allocation5], %s578
        %s580 = sand.u32 %s133, 1
        %s581 = smul.addr %s580, 32
        %s582 = scalar_lea.vmem [#allocation9], %s581
        // Predicated region
        $region57: #{tpu_custom_call.1} parent=35 // pred_check
          %p583 = pneg %p143
        $region58: #{tpu_custom_call.1} parent=35 // pred_check_branch
          %585 = sbr.rel (%p583) target = $region60
        $region59: #{tpu_custom_call.1} parent=35 // pred_region
          %s586 = smul.u32 8, %s26
          %588 = vsyncadd %s579, 0
          %s589 = smul.addr %s586, 4
          %s590 = scalar_lea.hbm %s4, %s589
          %s591 = sshll.u32 %s582, 4
          %s592 = int_to_ptr.vmem [resolvable:$true] %s591
          %s593 = sshll.u32 %s590, 4
          %s594 = int_to_ptr.hbm [resolvable:$true] %s593
          %599 = dma.vmem_to_hbm [thread:$0]  %s592, 512, %s594, %s579, 64, 64, 4
        $region60: #{tpu_custom_call.1} parent=35 // pred_fallthru
          _
      $region36: #{tpu_custom_call.1} parent=5 // pred_fallthru
        _
      %p600 = scmp.le.s32.totalorder 2, %s17
      // Predicated region
      $region61: #{tpu_custom_call.1} parent=5 // pred_check
        %p601 = pneg %p600
      $region62: #{tpu_custom_call.1} parent=5 // pred_check_branch
        %603 = sbr.rel (%p601) target = $region64
      $region63: #{tpu_custom_call.1} parent=5 // pred_region
        %s604 = ssub.s32 %s17, 2
        // Predicated region
        $region65: #{tpu_custom_call.1} parent=63 // pred_check
          %p605 = pneg %p149
        $region66: #{tpu_custom_call.1} parent=63 // pred_check_branch
          %607 = sbr.rel (%p605) target = $region68
        $region67: #{tpu_custom_call.1} parent=63 // pred_region
          %s608 = sand.u32 %s134, 1
          %s609 = scalar_lea.sflag [#allocation5], %s608
          %s610 = sand.u32 %s134, 1
          %s611 = smul.addr %s610, 32
          %s612 = scalar_lea.vmem [#allocation9], %s611
          %614 = dma.done %s609, 512
        $region68: #{tpu_custom_call.1} parent=63 // pred_fallthru
          _
      $region64: #{tpu_custom_call.1} parent=5 // pred_fallthru
        _
    $region6: #{tpu_custom_call.1} parent=1 // loop_footer
      %s21 = sadd.s32 1, %s17
    $region7: #{tpu_custom_call.1} parent=1 // loop_footer_branch
      %16 = sbr.rel target = $region3
    $region8: #{tpu_custom_call.1} parent=1 // loop_exit
      _
    %615 = vsyncpa [#allocation4], 1
    %s616 = scalar_lea.sflag [#allocation4], 1
    %617 = vsyncpa %s616, 1
    %618 = vsyncpa [#allocation7], 1
    %619 = vsyncpa [#allocation5], 1
    %s620 = scalar_lea.sflag [#allocation5], 1
    %621 = vsyncpa %s620, 1

</llo_original>
